<compile_context>
chip_gen: v5e
topology: v5e:2x2
jax: 0.10.0
libtpu: 0.0.40
codegen_flags: <defaults>
</compile_context>

<pallas_src>
import jax
import jax.numpy as jnp
from jax.experimental import pallas as pl
from jax.experimental.pallas import tpu as pltpu


def highway_kernel(x_ref, w_ref, b_ref, o_ref):
    x = x_ref[...]                                       # (tb, E) f32
    E = x.shape[1]
    # Single fused matmul: (tb, E) @ (E, 2E) -> (tb, 2E). bf16 operands feed the
    # MXU at its native rate; accumulation stays f32.
    y = jnp.dot(x.astype(jnp.bfloat16), w_ref[...],
                preferred_element_type=jnp.float32)
    y = y + b_ref[...]                                   # one fused bias add (1, 2E)
    proj = jnp.maximum(y[:, :E], 0.0)                    # relu branch
    gate = jax.nn.sigmoid(y[:, E:])                      # gate branch (EUP)
    # Highway combine: gate*(proj - x) + x  ==  proj*gate + (1-gate)*x
    o_ref[...] = (gate * (proj - x) + x).astype(o_ref.dtype)


def _pick_row_tile(B):
    # Largest row tile (multiple of 8, up to 512) that divides B: maximizes the
    # MXU M dimension and minimizes sequential grid steps; B >= 1024 still gets
    # >= 2 "parallel" steps so both v7x TensorCores have work.
    for tb in (512, 256, 128, 64, 32, 16, 8):
        if B % tb == 0:
            return tb
    raise ValueError("batch size must be a multiple of 8")


def highway_forward(x, w_proj, b_proj, w_gate, b_gate):
    """x: (B, E) f32; w_*: (E, E) in PyTorch (out, in) layout; b_*: (E,)."""
    B, E = x.shape
    tb = _pick_row_tile(B)
    grid = (B // tb,)

    # Glue (one-time, wrapper-side): fuse the two linears into one lane-dense
    # (E, 2E) weight in (in, out) layout, stored bf16; fuse biases to (1, 2E) f32.
    # TODO(synk): for production E, pre-store the fused/transposed bf16 weight in
    # the params instead of rebuilding it per call.
    w_fused = jnp.concatenate([w_proj.T, w_gate.T], axis=1).astype(jnp.bfloat16)
    b_fused = jnp.concatenate([b_proj, b_gate], axis=0).reshape(1, 2 * E)
    b_fused = b_fused.astype(jnp.float32)

    return pl.pallas_call(
        highway_kernel,
        out_shape=jax.ShapeDtypeStruct((B, E), x.dtype),
        grid_spec=pltpu.PrefetchScalarGridSpec(
            num_scalar_prefetch=0,
            grid=grid,
            in_specs=[
                pl.BlockSpec((tb, E), lambda i: (i, 0)),       # x row tile
                pl.BlockSpec((E, 2 * E), lambda i: (0, 0)),    # fused [Wp^T | Wg^T] (resident)
                pl.BlockSpec((1, 2 * E), lambda i: (0, 0)),    # fused [bp | bg]
            ],
            out_specs=pl.BlockSpec((tb, E), lambda i: (i, 0)),
        ),
        compiler_params=pltpu.CompilerParams(
            dimension_semantics=("parallel",),
        ),
    )(x, w_fused, b_fused)


def highway_reference(x, w_proj, b_proj, w_gate, b_gate):
    proj = jnp.maximum(x @ w_proj.T + b_proj, 0.0)
    gate = jax.nn.sigmoid(x @ w_gate.T + b_gate)
    return proj * gate + (1.0 - gate) * x


if __name__ == "__main__":
    B, E = 16, 64  # batch x e_word (toy shapes; whole problem fits one grid step)
    key = jax.random.PRNGKey(0)
    kx, kwp, kbp, kwg, kbg = jax.random.split(key, 5)

    # Deterministic synthetic params (shapes match nn.Linear(e_word, e_word)).
    bound = 1.0 / (E ** 0.5)
    x = jax.random.normal(kx, (B, E), dtype=jnp.float32)
    w_proj = jax.random.uniform(kwp, (E, E), jnp.float32, -bound, bound)
    b_proj = jax.random.uniform(kbp, (E,), jnp.float32, -bound, bound)
    w_gate = jax.random.uniform(kwg, (E, E), jnp.float32, -bound, bound)
    b_gate = jax.random.uniform(kbg, (E,), jnp.float32, -bound, bound)

    out = highway_forward(x, w_proj, b_proj, w_gate, b_gate)
    out = jax.block_until_ready(out)

    ref = highway_reference(x, w_proj, b_proj, w_gate, b_gate)
    assert out.shape == (B, E)
    # bf16 matmul operands (f32 accumulation) -> relaxed tolerance vs f32 reference.
    assert jnp.allclose(out, ref, atol=2e-2, rtol=2e-2), "mismatch vs reference"

    print("KERNEL_OK")
</pallas_src>

<mosaic_0001>
module attributes {stable_mosaic.version = 11 : i64} {
  func.func @highway_kernel(%arg0: i32, %arg1: memref<16x64xf32, #tpu.memory_space<vmem>>, %arg2: memref<64x128xbf16, #tpu.memory_space<vmem>>, %arg3: memref<1x128xf32, #tpu.memory_space<vmem>>, %arg4: memref<16x64xf32, #tpu.memory_space<vmem>>) attributes {dimension_semantics = [#tpu.dimension_semantics<parallel>], iteration_bounds = array<i64: 1>, scalar_prefetch = 0 : i64, scratch_operands = 0 : i64, tpu.core_type = #tpu.core_type<tc>, window_params = [{transform_indices = @transform_0, window_bounds = array<i64: 16, 64>}, {pipeline_mode = #tpu.pipeline_mode<synchronous>, transform_indices = @transform_1, window_bounds = array<i64: 64, 128>}, {pipeline_mode = #tpu.pipeline_mode<synchronous>, transform_indices = @transform_2, window_bounds = array<i64: 1, 128>}, {transform_indices = @transform_3, window_bounds = array<i64: 16, 64>}]} {
    %c0 = arith.constant 0 : index
    %c0_0 = arith.constant 0 : index
    %0 = vector.load %arg1[%c0, %c0_0] : memref<16x64xf32, #tpu.memory_space<vmem>>, vector<16x64xf32>
    %1 = arith.truncf %0 : vector<16x64xf32> to vector<16x64xbf16>
    %c0_1 = arith.constant 0 : index
    %c0_2 = arith.constant 0 : index
    %2 = vector.load %arg2[%c0_1, %c0_2] : memref<64x128xbf16, #tpu.memory_space<vmem>>, vector<64x128xbf16>
    %cst = arith.constant dense<0.000000e+00> : vector<16x128xf32>
    %3 = tpu.matmul %1, %2, %cst {dimension_numbers = #tpu.dot_dimension_numbers<[1], [0], [0], [1], [0, 0, 1, 1], [], []>} : vector<16x64xbf16>, vector<64x128xbf16>, vector<16x128xf32> -> vector<16x128xf32>
    %c0_3 = arith.constant 0 : index
    %c0_4 = arith.constant 0 : index
    %4 = vector.load %arg3[%c0_3, %c0_4] : memref<1x128xf32, #tpu.memory_space<vmem>>, vector<1x128xf32>
    %5 = vector.broadcast %4 : vector<1x128xf32> to vector<16x128xf32>
    %6 = arith.addf %3, %5 : vector<16x128xf32>
    %7 = vector.extract_strided_slice %6 {offsets = [0, 0], sizes = [16, 64], strides = [1, 1]} : vector<16x128xf32> to vector<16x64xf32>
    %cst_5 = arith.constant 0.000000e+00 : f32
    %8 = vector.broadcast %cst_5 : f32 to vector<16x64xf32>
    %9 = arith.maximumf %7, %8 : vector<16x64xf32>
    %10 = vector.extract_strided_slice %6 {offsets = [0, 64], sizes = [16, 64], strides = [1, 1]} : vector<16x128xf32> to vector<16x64xf32>
    %11 = arith.negf %10 : vector<16x64xf32>
    %12 = math.exp %11 : vector<16x64xf32>
    %cst_6 = arith.constant 1.000000e+00 : f32
    %13 = vector.broadcast %cst_6 : f32 to vector<16x64xf32>
    %14 = arith.addf %13, %12 : vector<16x64xf32>
    %15 = arith.divf %13, %14 : vector<16x64xf32>
    %16 = arith.subf %9, %0 : vector<16x64xf32>
    %17 = arith.mulf %15, %16 : vector<16x64xf32>
    %18 = arith.addf %17, %0 : vector<16x64xf32>
    %c0_7 = arith.constant 0 : index
    %c0_8 = arith.constant 0 : index
    %19 = vector.load %arg4[%c0_7, %c0_8] : memref<16x64xf32, #tpu.memory_space<vmem>>, vector<16x64xf32>
    tpu.vector_store %arg4[%c0_7, %c0_8], %18 {strides = array<i32>} : memref<16x64xf32, #tpu.memory_space<vmem>>, vector<16x64xf32>,
    return
  }
  func.func @transform_0(%arg0: i32) -> (i32, i32) {
    %c0_i32 = arith.constant 0 : i32
    %c0_i32_0 = arith.constant 0 : i32
    return %arg0, %c0_i32 : i32, i32
  }
  func.func @transform_1(%arg0: i32) -> (i32, i32) {
    %c0_i32 = arith.constant 0 : i32
    %c0_i32_0 = arith.constant 0 : i32
    %c0_i32_1 = arith.constant 0 : i32
    return %c0_i32, %c0_i32_0 : i32, i32
  }
  func.func @transform_2(%arg0: i32) -> (i32, i32) {
    %c0_i32 = arith.constant 0 : i32
    %c0_i32_0 = arith.constant 0 : i32
    %c0_i32_1 = arith.constant 0 : i32
    return %c0_i32, %c0_i32_0 : i32, i32
  }
  func.func @transform_3(%arg0: i32) -> (i32, i32) {
    %c0_i32 = arith.constant 0 : i32
    %c0_i32_0 = arith.constant 0 : i32
    return %arg0, %c0_i32 : i32, i32
  }
}

</mosaic_0001>

<llo_original>
// kernel: tpu_custom_call.1
$region0: #{tpu_custom_call.1}
  #allocation0 [shape = 'u32[]', space=smem, size = 0x4, offset = 0x4, fixed_abs, tag = 'smem constant byte address 0x4 - core index']
  #allocation1 [shape = 'u32[72,128]{1,0:T(1,128)}', space=vmem, size = 0x9000, scoped, tag = 'internal scratch']
  %s0 = inlined_call_operand.hbm [shape: f32[16,64], index: 0, kind: input, shape index: {}]
  %s1 = inlined_call_operand.hbm [shape: bf16[64,128], index: 1, kind: input, shape index: {}]
  %s2 = inlined_call_operand.vmem [shape: f32[1,128], index: 2, kind: input, shape index: {}]
  %s3 = inlined_call_operand.hbm [shape: f32[16,64], index: 3, kind: output, shape index: {}]
  %s4 = sld [smem:[#allocation0]]
  $region30: #{tpu_custom_call.1} parent=0
    _
  %s6 = ssub.s32 1, %s4
  %s7 = scalar_select 0, %s6, %s4
  $region1: #{tpu_custom_call.1} parent=0
    #allocation2 [shape = 'u8[8192]{0}', space=vmem, size = 0x2000, scoped, tag = 'input window, operand 0, single buffered']
    #allocation3 [shape = 's32[1]{0}', space=sflag, size = 0x4, scoped, tag = 'scoped memory for tpu_custom_call.1']
    #allocation4 [shape = 's32[1]{0}', space=sflag, size = 0x4, scoped, tag = 'scoped memory for tpu_custom_call.1']
    #allocation5 [shape = 'u8[16384]{0}', space=vmem, size = 0x4000, scoped, tag = 'input window, operand 1, single buffered']
    #allocation6 [shape = 's32[1]{0}', space=sflag, size = 0x4, scoped, tag = 'scoped memory for tpu_custom_call.1']
    #allocation7 [shape = 'u8[8192]{0}', space=vmem, size = 0x2000, scoped, tag = 'output window, operand 0, single buffered']
    %8 = vsyncpa [#allocation3], 0
    %9 = vsyncpa [#allocation6], 0
    %10 = vsyncpa [#allocation4], 0
    // Predicated region
    $region2: #{tpu_custom_call.1} parent=1 // pred_check
      _
    $region3: #{tpu_custom_call.1} parent=1 // pred_check_branch
      %12 = sbr.rel (0) target = $region5
    $region4: #{tpu_custom_call.1} parent=1 // pred_region
      %14 = vsyncadd [#allocation3], 0
      %s15 = sshll.u32 %s0, 4
      %s16 = int_to_ptr.hbm [resolvable:$true] %s15
      %s17 = sshll.u32 [#allocation2], 4
      %s18 = int_to_ptr.vmem [resolvable:$true] %s17
      %23 = dma.hbm_to_vmem [thread:$0]  %s16, 256, %s18, [#allocation3], 128, 128, 8
    $region5: #{tpu_custom_call.1} parent=1 // pred_fallthru
      _
    // Predicated region
    $region6: #{tpu_custom_call.1} parent=1 // pred_check
      _
    $region7: #{tpu_custom_call.1} parent=1 // pred_check_branch
      %25 = sbr.rel (0) target = $region9
    $region8: #{tpu_custom_call.1} parent=1 // pred_region
      %27 = vsyncadd [#allocation6], 0
      %s28 = sshll.u32 %s1, 4
      %s29 = int_to_ptr.hbm [resolvable:$true] %s28
      %s30 = sshll.u32 [#allocation5], 4
      %s31 = int_to_ptr.vmem [resolvable:$true] %s30
      %36 = dma.hbm_to_vmem [thread:$0]  %s29, 512, %s31, [#allocation6], 64, 64, 4
    $region9: #{tpu_custom_call.1} parent=1 // pred_fallthru
      _
    // Predicated region
    $region10: #{tpu_custom_call.1} parent=1 // pred_check
      _
    $region11: #{tpu_custom_call.1} parent=1 // pred_check_branch
      %38 = sbr.rel (0) target = $region13
    $region12: #{tpu_custom_call.1} parent=1 // pred_region
      _
    $region13: #{tpu_custom_call.1} parent=1 // pred_fallthru
      _
    // Predicated region
    $region14: #{tpu_custom_call.1} parent=1 // pred_check
      _
    $region15: #{tpu_custom_call.1} parent=1 // pred_check_branch
      %40 = sbr.rel (0) target = $region17
    $region16: #{tpu_custom_call.1} parent=1 // pred_region
      %42 = dma.done [#allocation3], 256
    $region17: #{tpu_custom_call.1} parent=1 // pred_fallthru
      _
    // Predicated region
    $region18: #{tpu_custom_call.1} parent=1 // pred_check
      _
    $region19: #{tpu_custom_call.1} parent=1 // pred_check_branch
      %44 = sbr.rel (0) target = $region21
    $region20: #{tpu_custom_call.1} parent=1 // pred_region
      %46 = dma.done [#allocation6], 512
    $region21: #{tpu_custom_call.1} parent=1 // pred_fallthru
      _
    %v48 = vld [vmem:[#allocation2] sm:$0xff]
    %v49 = vld [vmem:[#allocation2 + $0x8] sm:$0xff]
    %v50 = vpack.c.bf16 %v49, %v48
    %v51 = vld [vmem:[#allocation5] sm:$0xf]
    %v52 = vld [vmem:[#allocation5 + $0x4] sm:$0xf]
    %v53 = vld [vmem:[#allocation5 + $0x8] sm:$0xf]
    %v54 = vld [vmem:[#allocation5 + $0xc] sm:$0xf]
    %v55 = vld [vmem:[#allocation5 + $0x10] sm:$0xf]
    %v56 = vld [vmem:[#allocation5 + $0x14] sm:$0xf]
    %v57 = vld [vmem:[#allocation5 + $0x18] sm:$0xf]
    %v58 = vld [vmem:[#allocation5 + $0x1c] sm:$0xf]
    %v59 = vld [vmem:[%s2] sm:$0x1]
    %v61 = vperm.slane %v59, 0
    %v71 = vunpack.c.l.b16 %v51
    %v72 = vunpack.c.l.b16 %v52
    %v73 = vunpack.c.l.b16 %v53
    %v74 = vunpack.c.l.b16 %v54
    %v75 = vunpack.c.l.b16 %v55
    %v76 = vunpack.c.l.b16 %v56
    %v77 = vunpack.c.l.b16 %v57
    %v78 = vunpack.c.l.b16 %v58
    %v79 = vpack.c.b16 %v72, %v71
    %v80 = vpack.c.b16 %v74, %v73
    %v81 = vpack.c.b16 %v76, %v75
    %v82 = vpack.c.b16 %v78, %v77
    %vm87 = vcmask 523264
    %v89 = vsel %vm87, %v50, 0
    %91 = vmatpush.bf16.msra.mxu0 0
    %92 = vmatpush.bf16.msra.mxu0 0
    %93 = vmatpush.bf16.msra.mxu0 0
    %94 = vmatpush.bf16.msra.mxu0 0
    %95 = vmatpush.bf16.msra.mxu0 %v82
    %96 = vmatpush.bf16.msra.mxu0 %v81
    %97 = vmatpush.bf16.msra.mxu0 %v80
    %98 = vmatpush.bf16.msra.mxu0 %v79
    %99 = vmatmul.bf16.gmra.mxu0 %v89
    %v100 = vpop.f32.mrf.mxu0
    %v101 = vadd.f32 %v61, %v100
    %v102 = vpop.f32.mrf.mxu0
    %v103 = vadd.f32 %v61, %v102
    %104 = vdwg.mxu0
    %v105 = vmax.f32 %v101, 0.0
    %v106 = vmax.f32 %v103, 0.0
    %v107 = vxor.u32 %v101, 2147483648
    %v108 = vxor.u32 %v103, 2147483648
    %v109 = vmul.f32 %v107, 1.442695
    %v110 = vpow.pop %v109
    %v111 = vmul.f32 %v108, 1.442695
    %v112 = vpow.pop %v111
    %v113 = vadd.f32 %v110, 1.0
    %v114 = vadd.f32 %v112, 1.0
    %v115 = vrcp.pop %v113
    %v116 = vmul.f32 %v113, %v115
    %v117 = vsub.f32 1.0, %v116
    %v118 = vmul.f32 %v115, %v117
    %v119 = vadd.f32 %v115, %v118
    %vm120 = vweird.f32 %v113
    %vm121 = vweird.f32 %v115
    %vm122 = vmor %vm120, %vm121
    %v123 = vsel %vm122, %v115, %v119
    %v124 = vand.u32 2147483647, %v113
    %vm125 = vcmp.eq.f32.partialorder %v124, 8.507059e+37
    %v126 = vand.u32 %v113, 2147483648
    %v127 = vor.u32 1.1754944e-38, %v126
    %v128 = vsel %vm125, %v127, %v123
    %v129 = vmul.f32 1.0, %v128
    %v130 = vrcp.pop %v114
    %v131 = vmul.f32 %v114, %v130
    %v132 = vsub.f32 1.0, %v131
    %v133 = vmul.f32 %v130, %v132
    %v134 = vadd.f32 %v130, %v133
    %vm135 = vweird.f32 %v114
    %vm136 = vweird.f32 %v130
    %vm137 = vmor %vm135, %vm136
    %v138 = vsel %vm137, %v130, %v134
    %v139 = vand.u32 2147483647, %v114
    %vm140 = vcmp.eq.f32.partialorder %v139, 8.507059e+37
    %v141 = vand.u32 %v114, 2147483648
    %v142 = vor.u32 1.1754944e-38, %v141
    %v143 = vsel %vm140, %v142, %v138
    %v144 = vmul.f32 1.0, %v143
    %v145 = vsub.f32 %v105, %v48
    %v146 = vsub.f32 %v106, %v49
    %149 = vrot.lane.b32.xlu0 %v145, 64
    %v150 = vpop.permute.xlu0 %149
    %151 = vrot.lane.b32.xlu0 %v146, 64
    %v152 = vpop.permute.xlu0 %151
    %v155 = vmul.f32 %v129, %v150
    %v156 = vmul.f32 %v144, %v152
    %159 = vrot.lane.b32.xlu0 %v48, 64
    %v160 = vpop.permute.xlu0 %159
    %161 = vrot.lane.b32.xlu0 %v49, 64
    %v162 = vpop.permute.xlu0 %161
    %v165 = vadd.f32 %v155, %v160
    %v166 = vadd.f32 %v156, %v162
    %169 = vrot.lane.b32.xlu0 %v165, 64
    %v170 = vpop.permute.xlu0 %169
    %171 = vrot.lane.b32.xlu0 %v166, 64
    %v172 = vpop.permute.xlu0 %171
    %175 = vst.msk [vmem:[#allocation7] sm:$0xff] %vm87, %v170
    %176 = vst.msk [vmem:[#allocation7 + $0x8] sm:$0xff] %vm87, %v172
    // Predicated region
    $region22: #{tpu_custom_call.1} parent=1 // pred_check
      _
    $region23: #{tpu_custom_call.1} parent=1 // pred_check_branch
      %178 = sbr.rel (0) target = $region25
    $region24: #{tpu_custom_call.1} parent=1 // pred_region
      %180 = vsyncadd [#allocation4], 0
      %s181 = sshll.u32 [#allocation7], 4
      %s182 = int_to_ptr.vmem [resolvable:$true] %s181
      %s183 = sshll.u32 %s3, 4
      %s184 = int_to_ptr.hbm [resolvable:$true] %s183
      %189 = dma.vmem_to_hbm [thread:$0]  %s182, 256, %s184, [#allocation4], 128, 128, 8
    $region25: #{tpu_custom_call.1} parent=1 // pred_fallthru
      _
    // Predicated region
    $region26: #{tpu_custom_call.1} parent=1 // pred_check
      _
    $region27: #{tpu_custom_call.1} parent=1 // pred_check_branch
      %191 = sbr.rel (0) target = $region29
    $region28: #{tpu_custom_call.1} parent=1 // pred_region
      %193 = dma.done [#allocation4], 256
    $region29: #{tpu_custom_call.1} parent=1 // pred_fallthru
      _
    %194 = vsyncpa [#allocation3], 1
    %195 = vsyncpa [#allocation6], 1
    %196 = vsyncpa [#allocation4], 1

</llo_original>
